<compile_context>
chip_gen: v5e
topology: v5e:2x2
jax: 0.10.0
libtpu: 0.0.40
codegen_flags: <defaults>
</compile_context>

<pallas_src>
import jax
import jax.numpy as jnp
from jax.experimental import pallas as pl
from jax.experimental.pallas import tpu as pltpu

# Layer sizes of MyModel
DIMS = [13, 64, 128, 128, 128, 96, 32, 12]
NL = len(DIMS) - 1          # 7 linear layers
PAD = 128                   # uniform lane-dense width for all layers

# activation per layer: 0=tanh, 1=log_sigmoid, 2=relu, 3=identity
ACTS = (0, 1, 2, 2, 0, 1, 3)


def _log_sigmoid(x):
    # Numerically stable log(sigmoid(x)) = min(x, 0) - log1p(exp(-|x|))
    return jnp.minimum(x, 0.0) - jnp.log1p(jnp.exp(-jnp.abs(x)))


def _apply_act(a, x):
    if a == 0:
        return jnp.tanh(x)
    if a == 1:
        return _log_sigmoid(x)
    if a == 2:
        return jnp.maximum(x, 0.0)
    return x


def mlp_kernel(x_ref, w_ref, b_ref, o_ref):
    # x_ref : (TB, 128)      zero-padded input rows (f32)
    # w_ref : (7, 128, 128)  pre-transposed (in, out), zero-padded weights
    # b_ref : (7, 1, 128)    zero-padded biases
    # o_ref : (TB, 128)      lane-dense padded output
    h = x_ref[...]
    for l in range(NL):                       # unrolled at trace time
        y = jnp.dot(h, w_ref[l], preferred_element_type=jnp.float32) + b_ref[l]
        h = _apply_act(ACTS[l], y)
    o_ref[...] = h.astype(o_ref.dtype)


def init_params(key):
    """Deterministic PyTorch-Linear-style init: U(-1/sqrt(fan_in), 1/sqrt(fan_in)).
    Weights stored PyTorch-style as (out_features, in_features)."""
    params = []
    for i in range(NL):
        fan_in, fan_out = DIMS[i], DIMS[i + 1]
        key, kw, kb = jax.random.split(key, 3)
        bound = 1.0 / jnp.sqrt(fan_in)
        w = jax.random.uniform(kw, (fan_out, fan_in), jnp.float32, -bound, bound)
        b = jax.random.uniform(kb, (fan_out,), jnp.float32, -bound, bound)
        params.append((w, b))
    return params


def pack_params(params):
    """Host-side: transpose to (in, out), zero-pad to 128x128, stack all layers."""
    w_stack = jnp.zeros((NL, PAD, PAD), jnp.float32)
    b_stack = jnp.zeros((NL, 1, PAD), jnp.float32)
    for l, (w, b) in enumerate(params):
        fo, fi = w.shape
        w_stack = w_stack.at[l, :fi, :fo].set(w.T)
        b_stack = b_stack.at[l, 0, :fo].set(b.reshape(-1))
    return w_stack, b_stack


def _round_up(n, m):
    return ((n + m - 1) // m) * m


def my_model_forward(x, params, *, batch_tile=512):
    B = x.shape[0]
    # Batch tile: multiple of 8 sublanes, capped so double-buffered x/out tiles
    # + the ~0.5 MiB weight stack fit comfortably in VMEM on v7x (64 MiB phys).
    TB = min(batch_tile, _round_up(B, 8))
    Bp = _round_up(B, TB)
    nb = Bp // TB

    # Zero-pad input to (Bp, 128) so the kernel sees lane-dense f32 tiles.
    xp = jnp.zeros((Bp, PAD), jnp.float32).at[:B, :DIMS[0]].set(
        x.astype(jnp.float32))
    w_stack, b_stack = pack_params(params)

    out_padded = pl.pallas_call(
        mlp_kernel,
        out_shape=jax.ShapeDtypeStruct((Bp, PAD), jnp.float32),
        grid=(nb,),
        in_specs=[
            pl.BlockSpec((TB, PAD), lambda i: (i, 0)),          # x tile
            pl.BlockSpec((NL, PAD, PAD), lambda i: (0, 0, 0)),  # weights (resident)
            pl.BlockSpec((NL, 1, PAD), lambda i: (0, 0, 0)),    # biases  (resident)
        ],
        out_specs=pl.BlockSpec((TB, PAD), lambda i: (i, 0)),
        compiler_params=pltpu.CompilerParams(
            dimension_semantics=("parallel",),
        ),
    )(xp, w_stack, b_stack)

    # Slice back to the real batch and the real 12-wide output.
    return out_padded[:B, :DIMS[-1]]


def reference_forward(x, params):
    def lin(h, w, b):
        return h @ w.T + b
    h = jnp.tanh(lin(x, *params[0]))
    h = jax.nn.log_sigmoid(lin(h, *params[1]))
    h = jax.nn.relu(lin(h, *params[2]))
    h = jax.nn.relu(lin(h, *params[3]))
    h = jnp.tanh(lin(h, *params[4]))
    h = jax.nn.log_sigmoid(lin(h, *params[5]))
    h = lin(h, *params[6])
    return h


if __name__ == "__main__":
    key = jax.random.PRNGKey(0)
    kx, kp = jax.random.split(key)
    B = 8
    x = jax.random.normal(kx, (B, DIMS[0]), jnp.float32)
    params = init_params(kp)

    out = my_model_forward(x, params)
    out = jax.block_until_ready(out)

    ref = reference_forward(x, params)
    assert out.shape == (B, DIMS[-1]), out.shape
    assert jnp.allclose(out, ref, atol=1e-5, rtol=1e-5), "mismatch vs reference"
    print("KERNEL_OK")
</pallas_src>

<mosaic_0001>
module attributes {stable_mosaic.version = 11 : i64} {
  func.func @mlp_kernel(%arg0: i32, %arg1: memref<8x128xf32, #tpu.memory_space<vmem>>, %arg2: memref<7x128x128xf32, #tpu.memory_space<vmem>>, %arg3: memref<7x1x128xf32, #tpu.memory_space<vmem>>, %arg4: memref<8x128xf32, #tpu.memory_space<vmem>>) attributes {dimension_semantics = [#tpu.dimension_semantics<parallel>], iteration_bounds = array<i64: 1>, scalar_prefetch = 0 : i64, scratch_operands = 0 : i64, tpu.core_type = #tpu.core_type<tc>, window_params = [{transform_indices = @transform_0, window_bounds = array<i64: 8, 128>}, {pipeline_mode = #tpu.pipeline_mode<synchronous>, transform_indices = @transform_1, window_bounds = array<i64: 7, 128, 128>}, {pipeline_mode = #tpu.pipeline_mode<synchronous>, transform_indices = @transform_2, window_bounds = array<i64: 7, 1, 128>}, {transform_indices = @transform_3, window_bounds = array<i64: 8, 128>}]} {
    %c0 = arith.constant 0 : index
    %c0_0 = arith.constant 0 : index
    %0 = vector.load %arg1[%c0, %c0_0] : memref<8x128xf32, #tpu.memory_space<vmem>>, vector<8x128xf32>
    %c0_1 = arith.constant 0 : index
    %c0_2 = arith.constant 0 : index
    %c0_3 = arith.constant 0 : index
    %1 = vector.load %arg2[%c0_1, %c0_2, %c0_3] : memref<7x128x128xf32, #tpu.memory_space<vmem>>, vector<1x128x128xf32>
    %2 = vector.shape_cast %1 : vector<1x128x128xf32> to vector<128x128xf32>
    %cst = arith.constant dense<0.000000e+00> : vector<8x128xf32>
    %3 = tpu.matmul %0, %2, %cst {dimension_numbers = #tpu.dot_dimension_numbers<[1], [0], [0], [1], [0, 0, 1, 1], [], []>} : vector<8x128xf32>, vector<128x128xf32>, vector<8x128xf32> -> vector<8x128xf32>
    %c0_4 = arith.constant 0 : index
    %c0_5 = arith.constant 0 : index
    %c0_6 = arith.constant 0 : index
    %4 = vector.load %arg3[%c0_4, %c0_5, %c0_6] : memref<7x1x128xf32, #tpu.memory_space<vmem>>, vector<1x1x128xf32>
    %5 = vector.shape_cast %4 : vector<1x1x128xf32> to vector<1x128xf32>
    %6 = vector.broadcast %5 : vector<1x128xf32> to vector<8x128xf32>
    %7 = arith.addf %3, %6 : vector<8x128xf32>
    %8 = math.tanh %7 : vector<8x128xf32>
    %c1 = arith.constant 1 : index
    %c0_7 = arith.constant 0 : index
    %c0_8 = arith.constant 0 : index
    %9 = vector.load %arg2[%c1, %c0_7, %c0_8] : memref<7x128x128xf32, #tpu.memory_space<vmem>>, vector<1x128x128xf32>
    %10 = vector.shape_cast %9 : vector<1x128x128xf32> to vector<128x128xf32>
    %cst_9 = arith.constant dense<0.000000e+00> : vector<8x128xf32>
    %11 = tpu.matmul %8, %10, %cst_9 {dimension_numbers = #tpu.dot_dimension_numbers<[1], [0], [0], [1], [0, 0, 1, 1], [], []>} : vector<8x128xf32>, vector<128x128xf32>, vector<8x128xf32> -> vector<8x128xf32>
    %c1_10 = arith.constant 1 : index
    %c0_11 = arith.constant 0 : index
    %c0_12 = arith.constant 0 : index
    %12 = vector.load %arg3[%c1_10, %c0_11, %c0_12] : memref<7x1x128xf32, #tpu.memory_space<vmem>>, vector<1x1x128xf32>
    %13 = vector.shape_cast %12 : vector<1x1x128xf32> to vector<1x128xf32>
    %14 = vector.broadcast %13 : vector<1x128xf32> to vector<8x128xf32>
    %15 = arith.addf %11, %14 : vector<8x128xf32>
    %cst_13 = arith.constant 0.000000e+00 : f32
    %16 = vector.broadcast %cst_13 : f32 to vector<8x128xf32>
    %17 = arith.minimumf %15, %16 : vector<8x128xf32>
    %18 = math.absf %15 : vector<8x128xf32>
    %cst_14 = arith.constant 0.000000e+00 : f32
    %19 = vector.broadcast %cst_14 : f32 to vector<8x128xf32>
    %20 = arith.subf %19, %18 : vector<8x128xf32>
    %21 = math.exp %20 : vector<8x128xf32>
    %22 = math.log1p %21 : vector<8x128xf32>
    %23 = arith.subf %17, %22 : vector<8x128xf32>
    %c2 = arith.constant 2 : index
    %c0_15 = arith.constant 0 : index
    %c0_16 = arith.constant 0 : index
    %24 = vector.load %arg2[%c2, %c0_15, %c0_16] : memref<7x128x128xf32, #tpu.memory_space<vmem>>, vector<1x128x128xf32>
    %25 = vector.shape_cast %24 : vector<1x128x128xf32> to vector<128x128xf32>
    %cst_17 = arith.constant dense<0.000000e+00> : vector<8x128xf32>
    %26 = tpu.matmul %23, %25, %cst_17 {dimension_numbers = #tpu.dot_dimension_numbers<[1], [0], [0], [1], [0, 0, 1, 1], [], []>} : vector<8x128xf32>, vector<128x128xf32>, vector<8x128xf32> -> vector<8x128xf32>
    %c2_18 = arith.constant 2 : index
    %c0_19 = arith.constant 0 : index
    %c0_20 = arith.constant 0 : index
    %27 = vector.load %arg3[%c2_18, %c0_19, %c0_20] : memref<7x1x128xf32, #tpu.memory_space<vmem>>, vector<1x1x128xf32>
    %28 = vector.shape_cast %27 : vector<1x1x128xf32> to vector<1x128xf32>
    %29 = vector.broadcast %28 : vector<1x128xf32> to vector<8x128xf32>
    %30 = arith.addf %26, %29 : vector<8x128xf32>
    %cst_21 = arith.constant 0.000000e+00 : f32
    %31 = vector.broadcast %cst_21 : f32 to vector<8x128xf32>
    %32 = arith.maximumf %30, %31 : vector<8x128xf32>
    %c3 = arith.constant 3 : index
    %c0_22 = arith.constant 0 : index
    %c0_23 = arith.constant 0 : index
    %33 = vector.load %arg2[%c3, %c0_22, %c0_23] : memref<7x128x128xf32, #tpu.memory_space<vmem>>, vector<1x128x128xf32>
    %34 = vector.shape_cast %33 : vector<1x128x128xf32> to vector<128x128xf32>
    %cst_24 = arith.constant dense<0.000000e+00> : vector<8x128xf32>
    %35 = tpu.matmul %32, %34, %cst_24 {dimension_numbers = #tpu.dot_dimension_numbers<[1], [0], [0], [1], [0, 0, 1, 1], [], []>} : vector<8x128xf32>, vector<128x128xf32>, vector<8x128xf32> -> vector<8x128xf32>
    %c3_25 = arith.constant 3 : index
    %c0_26 = arith.constant 0 : index
    %c0_27 = arith.constant 0 : index
    %36 = vector.load %arg3[%c3_25, %c0_26, %c0_27] : memref<7x1x128xf32, #tpu.memory_space<vmem>>, vector<1x1x128xf32>
    %37 = vector.shape_cast %36 : vector<1x1x128xf32> to vector<1x128xf32>
    %38 = vector.broadcast %37 : vector<1x128xf32> to vector<8x128xf32>
    %39 = arith.addf %35, %38 : vector<8x128xf32>
    %cst_28 = arith.constant 0.000000e+00 : f32
    %40 = vector.broadcast %cst_28 : f32 to vector<8x128xf32>
    %41 = arith.maximumf %39, %40 : vector<8x128xf32>
    %c4 = arith.constant 4 : index
    %c0_29 = arith.constant 0 : index
    %c0_30 = arith.constant 0 : index
    %42 = vector.load %arg2[%c4, %c0_29, %c0_30] : memref<7x128x128xf32, #tpu.memory_space<vmem>>, vector<1x128x128xf32>
    %43 = vector.shape_cast %42 : vector<1x128x128xf32> to vector<128x128xf32>
    %cst_31 = arith.constant dense<0.000000e+00> : vector<8x128xf32>
    %44 = tpu.matmul %41, %43, %cst_31 {dimension_numbers = #tpu.dot_dimension_numbers<[1], [0], [0], [1], [0, 0, 1, 1], [], []>} : vector<8x128xf32>, vector<128x128xf32>, vector<8x128xf32> -> vector<8x128xf32>
    %c4_32 = arith.constant 4 : index
    %c0_33 = arith.constant 0 : index
    %c0_34 = arith.constant 0 : index
    %45 = vector.load %arg3[%c4_32, %c0_33, %c0_34] : memref<7x1x128xf32, #tpu.memory_space<vmem>>, vector<1x1x128xf32>
    %46 = vector.shape_cast %45 : vector<1x1x128xf32> to vector<1x128xf32>
    %47 = vector.broadcast %46 : vector<1x128xf32> to vector<8x128xf32>
    %48 = arith.addf %44, %47 : vector<8x128xf32>
    %49 = math.tanh %48 : vector<8x128xf32>
    %c5 = arith.constant 5 : index
    %c0_35 = arith.constant 0 : index
    %c0_36 = arith.constant 0 : index
    %50 = vector.load %arg2[%c5, %c0_35, %c0_36] : memref<7x128x128xf32, #tpu.memory_space<vmem>>, vector<1x128x128xf32>
    %51 = vector.shape_cast %50 : vector<1x128x128xf32> to vector<128x128xf32>
    %cst_37 = arith.constant dense<0.000000e+00> : vector<8x128xf32>
    %52 = tpu.matmul %49, %51, %cst_37 {dimension_numbers = #tpu.dot_dimension_numbers<[1], [0], [0], [1], [0, 0, 1, 1], [], []>} : vector<8x128xf32>, vector<128x128xf32>, vector<8x128xf32> -> vector<8x128xf32>
    %c5_38 = arith.constant 5 : index
    %c0_39 = arith.constant 0 : index
    %c0_40 = arith.constant 0 : index
    %53 = vector.load %arg3[%c5_38, %c0_39, %c0_40] : memref<7x1x128xf32, #tpu.memory_space<vmem>>, vector<1x1x128xf32>
    %54 = vector.shape_cast %53 : vector<1x1x128xf32> to vector<1x128xf32>
    %55 = vector.broadcast %54 : vector<1x128xf32> to vector<8x128xf32>
    %56 = arith.addf %52, %55 : vector<8x128xf32>
    %cst_41 = arith.constant 0.000000e+00 : f32
    %57 = vector.broadcast %cst_41 : f32 to vector<8x128xf32>
    %58 = arith.minimumf %56, %57 : vector<8x128xf32>
    %59 = math.absf %56 : vector<8x128xf32>
    %cst_42 = arith.constant 0.000000e+00 : f32
    %60 = vector.broadcast %cst_42 : f32 to vector<8x128xf32>
    %61 = arith.subf %60, %59 : vector<8x128xf32>
    %62 = math.exp %61 : vector<8x128xf32>
    %63 = math.log1p %62 : vector<8x128xf32>
    %64 = arith.subf %58, %63 : vector<8x128xf32>
    %c6 = arith.constant 6 : index
    %c0_43 = arith.constant 0 : index
    %c0_44 = arith.constant 0 : index
    %65 = vector.load %arg2[%c6, %c0_43, %c0_44] : memref<7x128x128xf32, #tpu.memory_space<vmem>>, vector<1x128x128xf32>
    %66 = vector.shape_cast %65 : vector<1x128x128xf32> to vector<128x128xf32>
    %cst_45 = arith.constant dense<0.000000e+00> : vector<8x128xf32>
    %67 = tpu.matmul %64, %66, %cst_45 {dimension_numbers = #tpu.dot_dimension_numbers<[1], [0], [0], [1], [0, 0, 1, 1], [], []>} : vector<8x128xf32>, vector<128x128xf32>, vector<8x128xf32> -> vector<8x128xf32>
    %c6_46 = arith.constant 6 : index
    %c0_47 = arith.constant 0 : index
    %c0_48 = arith.constant 0 : index
    %68 = vector.load %arg3[%c6_46, %c0_47, %c0_48] : memref<7x1x128xf32, #tpu.memory_space<vmem>>, vector<1x1x128xf32>
    %69 = vector.shape_cast %68 : vector<1x1x128xf32> to vector<1x128xf32>
    %70 = vector.broadcast %69 : vector<1x128xf32> to vector<8x128xf32>
    %71 = arith.addf %67, %70 : vector<8x128xf32>
    %c0_49 = arith.constant 0 : index
    %c0_50 = arith.constant 0 : index
    %72 = vector.load %arg4[%c0_49, %c0_50] : memref<8x128xf32, #tpu.memory_space<vmem>>, vector<8x128xf32>
    tpu.vector_store %arg4[%c0_49, %c0_50], %71 {strides = array<i32>} : memref<8x128xf32, #tpu.memory_space<vmem>>, vector<8x128xf32>,
    return
  }
  func.func @transform_0(%arg0: i32) -> (i32, i32) {
    %c0_i32 = arith.constant 0 : i32
    %c0_i32_0 = arith.constant 0 : i32
    return %arg0, %c0_i32 : i32, i32
  }
  func.func @transform_1(%arg0: i32) -> (i32, i32, i32) {
    %c0_i32 = arith.constant 0 : i32
    %c0_i32_0 = arith.constant 0 : i32
    %c0_i32_1 = arith.constant 0 : i32
    %c0_i32_2 = arith.constant 0 : i32
    return %c0_i32, %c0_i32_0, %c0_i32_1 : i32, i32, i32
  }
  func.func @transform_2(%arg0: i32) -> (i32, i32, i32) {
    %c0_i32 = arith.constant 0 : i32
    %c0_i32_0 = arith.constant 0 : i32
    %c0_i32_1 = arith.constant 0 : i32
    %c0_i32_2 = arith.constant 0 : i32
    return %c0_i32, %c0_i32_0, %c0_i32_1 : i32, i32, i32
  }
  func.func @transform_3(%arg0: i32) -> (i32, i32) {
    %c0_i32 = arith.constant 0 : i32
    %c0_i32_0 = arith.constant 0 : i32
    return %arg0, %c0_i32 : i32, i32
  }
}

</mosaic_0001>

<llo_original>
// kernel: tpu_custom_call.1
$region0: #{tpu_custom_call.1}
  #allocation0 [shape = 'u32[]', space=smem, size = 0x4, offset = 0x4, fixed_abs, tag = 'smem constant byte address 0x4 - core index']
  #allocation1 [shape = 'u32[72,128]{1,0:T(1,128)}', space=vmem, size = 0x9000, scoped, tag = 'internal scratch']
  %s0 = inlined_call_operand.hbm [shape: f32[8,128], index: 0, kind: input, shape index: {}]
  %s1 = inlined_call_operand.hbm [shape: f32[7,128,128], index: 1, kind: input, shape index: {}]
  %s2 = inlined_call_operand.hbm [shape: f32[7,1,128], index: 2, kind: input, shape index: {}]
  %s3 = inlined_call_operand.hbm [shape: f32[8,128], index: 3, kind: output, shape index: {}]
  %s4 = sld [smem:[#allocation0]]
  $region34: #{tpu_custom_call.1} parent=0
    _
  %s6 = ssub.s32 1, %s4
  %s7 = scalar_select 0, %s6, %s4
  $region1: #{tpu_custom_call.1} parent=0
    #allocation2 [shape = 'u8[4096]{0}', space=vmem, size = 0x1000, scoped, tag = 'input window, operand 0, single buffered']
    #allocation3 [shape = 's32[1]{0}', space=sflag, size = 0x4, scoped, tag = 'scoped memory for tpu_custom_call.1']
    #allocation4 [shape = 's32[1]{0}', space=sflag, size = 0x4, scoped, tag = 'scoped memory for tpu_custom_call.1']
    #allocation5 [shape = 'u8[458752]{0}', space=vmem, size = 0x70000, scoped, tag = 'input window, operand 1, single buffered']
    #allocation6 [shape = 's32[1]{0}', space=sflag, size = 0x4, scoped, tag = 'scoped memory for tpu_custom_call.1']
    #allocation7 [shape = 'u8[3584]{0}', space=vmem, size = 0x1000, scoped, tag = 'input window, operand 2, single buffered']
    #allocation8 [shape = 'u8[4096]{0}', space=vmem, size = 0x1000, scoped, tag = 'output window, operand 0, single buffered']
    %8 = vsyncpa [#allocation3], 0
    %9 = vsyncpa [#allocation6], 0
    %10 = vsyncpa [#allocation4], 0
    // Predicated region
    $region2: #{tpu_custom_call.1} parent=1 // pred_check
      _
    $region3: #{tpu_custom_call.1} parent=1 // pred_check_branch
      %12 = sbr.rel (0) target = $region5
    $region4: #{tpu_custom_call.1} parent=1 // pred_region
      %14 = vsyncadd [#allocation3], 0
      %s16 = sshll.u32 %s0, 4
      %s17 = int_to_ptr.hbm [resolvable:$true] %s16
      %s18 = sshll.u32 [#allocation2], 4
      %s19 = int_to_ptr.vmem [resolvable:$true] %s18
      %21 = dma.hbm_to_vmem [thread:$0]  %s17, 128, %s19, [#allocation3]
    $region5: #{tpu_custom_call.1} parent=1 // pred_fallthru
      _
    // Predicated region
    $region6: #{tpu_custom_call.1} parent=1 // pred_check
      _
    $region7: #{tpu_custom_call.1} parent=1 // pred_check_branch
      %23 = sbr.rel (0) target = $region9
    $region8: #{tpu_custom_call.1} parent=1 // pred_region
      %25 = vsyncadd [#allocation6], 0
      %s26 = sshll.u32 %s1, 4
      %s27 = int_to_ptr.hbm [resolvable:$true] %s26
      %s28 = sshll.u32 [#allocation5], 4
      %s29 = int_to_ptr.vmem [resolvable:$true] %s28
      %34 = dma.hbm_to_vmem [thread:$0]  %s27, 14336, %s29, [#allocation6], 128, 128, 8
    $region9: #{tpu_custom_call.1} parent=1 // pred_fallthru
      _
    // Predicated region
    $region10: #{tpu_custom_call.1} parent=1 // pred_check
      _
    $region11: #{tpu_custom_call.1} parent=1 // pred_check_branch
      %36 = sbr.rel (0) target = $region13
    $region12: #{tpu_custom_call.1} parent=1 // pred_region
      %38 = vsyncadd [#allocation6], 0
      %s39 = sshll.u32 %s2, 4
      %s40 = int_to_ptr.hbm [resolvable:$true] %s39
      %s41 = sshll.u32 [#allocation7], 4
      %s42 = int_to_ptr.vmem [resolvable:$true] %s41
      %47 = dma.hbm_to_vmem [thread:$0]  %s40, 112, %s42, [#allocation6], 16, 16, 1
    $region13: #{tpu_custom_call.1} parent=1 // pred_fallthru
      _
    // Predicated region
    $region14: #{tpu_custom_call.1} parent=1 // pred_check
      _
    $region15: #{tpu_custom_call.1} parent=1 // pred_check_branch
      %49 = sbr.rel (0) target = $region17
    $region16: #{tpu_custom_call.1} parent=1 // pred_region
      %51 = dma.done [#allocation3], 128
    $region17: #{tpu_custom_call.1} parent=1 // pred_fallthru
      _
    // Predicated region
    $region18: #{tpu_custom_call.1} parent=1 // pred_check
      _
    $region19: #{tpu_custom_call.1} parent=1 // pred_check_branch
      %53 = sbr.rel (0) target = $region21
    $region20: #{tpu_custom_call.1} parent=1 // pred_region
      %55 = dma.done [#allocation6], 14336
    $region21: #{tpu_custom_call.1} parent=1 // pred_fallthru
      _
    // Predicated region
    $region22: #{tpu_custom_call.1} parent=1 // pred_check
      _
    $region23: #{tpu_custom_call.1} parent=1 // pred_check_branch
      %57 = sbr.rel (0) target = $region25
    $region24: #{tpu_custom_call.1} parent=1 // pred_region
      %59 = dma.done [#allocation6], 112
    $region25: #{tpu_custom_call.1} parent=1 // pred_fallthru
      _
    %v60 = vld [vmem:[#allocation2] sm:$0xff]
    %v61 = vld [vmem:[#allocation5] sm:$0xff]
    %v62 = vld [vmem:[#allocation5 + $0x8] sm:$0xff]
    %v63 = vld [vmem:[#allocation5 + $0x10] sm:$0xff]
    %v64 = vld [vmem:[#allocation5 + $0x18] sm:$0xff]
    %v65 = vld [vmem:[#allocation5 + $0x20] sm:$0xff]
    %v66 = vld [vmem:[#allocation5 + $0x28] sm:$0xff]
    %v67 = vld [vmem:[#allocation5 + $0x30] sm:$0xff]
    %v68 = vld [vmem:[#allocation5 + $0x38] sm:$0xff]
    %v69 = vld [vmem:[#allocation5 + $0x40] sm:$0xff]
    %v70 = vld [vmem:[#allocation5 + $0x48] sm:$0xff]
    %v71 = vld [vmem:[#allocation5 + $0x50] sm:$0xff]
    %v72 = vld [vmem:[#allocation5 + $0x58] sm:$0xff]
    %v73 = vld [vmem:[#allocation5 + $0x60] sm:$0xff]
    %v74 = vld [vmem:[#allocation5 + $0x68] sm:$0xff]
    %v75 = vld [vmem:[#allocation5 + $0x70] sm:$0xff]
    %v76 = vld [vmem:[#allocation5 + $0x78] sm:$0xff]
    %v77 = vld [vmem:[#allocation7] sm:$0x1]
    %v79 = vperm.slane %v77, 0
    %81 = vmatpush.msra.mxu0 %v76
    %82 = vmatpush.msra.mxu0 %v75
    %83 = vmatpush.msra.mxu0 %v74
    %84 = vmatpush.msra.mxu0 %v73
    %85 = vmatpush.msra.mxu0 %v72
    %86 = vmatpush.msra.mxu0 %v71
    %87 = vmatpush.msra.mxu0 %v70
    %88 = vmatpush.msra.mxu0 %v69
    %89 = vmatpush.msra.mxu0 %v68
    %90 = vmatpush.msra.mxu0 %v67
    %91 = vmatpush.msra.mxu0 %v66
    %92 = vmatpush.msra.mxu0 %v65
    %93 = vmatpush.msra.mxu0 %v64
    %94 = vmatpush.msra.mxu0 %v63
    %95 = vmatpush.msra.mxu0 %v62
    %96 = vmatpush.msra.mxu0 %v61
    %97 = vmatmul.f32.gmra.mxu0 %v60
    %v98 = vpop.f32.mrf.mxu0
    %v99 = vadd.f32 %v79, %v98
    %100 = vdwg.mxu0
    %v101 = vtanh.pop %v99
    %s102 = scalar_lea.vmem [#allocation5], 128
    %v103 = vld [vmem:[%s102] sm:$0xff]
    %v104 = vld [vmem:[%s102 + $0x8] sm:$0xff]
    %v105 = vld [vmem:[%s102 + $0x10] sm:$0xff]
    %v106 = vld [vmem:[%s102 + $0x18] sm:$0xff]
    %v107 = vld [vmem:[%s102 + $0x20] sm:$0xff]
    %v108 = vld [vmem:[%s102 + $0x28] sm:$0xff]
    %v109 = vld [vmem:[%s102 + $0x30] sm:$0xff]
    %v110 = vld [vmem:[%s102 + $0x38] sm:$0xff]
    %v111 = vld [vmem:[%s102 + $0x40] sm:$0xff]
    %v112 = vld [vmem:[%s102 + $0x48] sm:$0xff]
    %v113 = vld [vmem:[%s102 + $0x50] sm:$0xff]
    %v114 = vld [vmem:[%s102 + $0x58] sm:$0xff]
    %v115 = vld [vmem:[%s102 + $0x60] sm:$0xff]
    %v116 = vld [vmem:[%s102 + $0x68] sm:$0xff]
    %v117 = vld [vmem:[%s102 + $0x70] sm:$0xff]
    %v118 = vld [vmem:[%s102 + $0x78] sm:$0xff]
    %s119 = scalar_lea.vmem [#allocation7], 1
    %v120 = vld [vmem:[%s119] sm:$0x1]
    %v122 = vperm.slane %v120, 0
    %124 = vmatpush.msra.mxu0 %v118
    %125 = vmatpush.msra.mxu0 %v117
    %126 = vmatpush.msra.mxu0 %v116
    %127 = vmatpush.msra.mxu0 %v115
    %128 = vmatpush.msra.mxu0 %v114
    %129 = vmatpush.msra.mxu0 %v113
    %130 = vmatpush.msra.mxu0 %v112
    %131 = vmatpush.msra.mxu0 %v111
    %132 = vmatpush.msra.mxu0 %v110
    %133 = vmatpush.msra.mxu0 %v109
    %134 = vmatpush.msra.mxu0 %v108
    %135 = vmatpush.msra.mxu0 %v107
    %136 = vmatpush.msra.mxu0 %v106
    %137 = vmatpush.msra.mxu0 %v105
    %138 = vmatpush.msra.mxu0 %v104
    %139 = vmatpush.msra.mxu0 %v103
    %140 = vmatmul.f32.gmra.mxu0 %v101
    %v141 = vpop.f32.mrf.mxu0
    %v142 = vadd.f32 %v122, %v141
    %143 = vdwg.mxu0
    %v144 = vmin.f32 %v142, 0.0
    %v145 = vand.u32 2147483647, %v142
    %v146 = vsub.f32 0.0, %v145
    %v147 = vmul.f32 %v146, 1.442695
    %v148 = vpow.pop %v147
    %v149 = vadd.f32 %v148, 1.0
    %v150 = vlog2.pop %v149
    %v151 = vmul.f32 %v150, 0.6931472
    %v152 = vmul.f32 -0.5, %v148
    %v153 = vadd.f32 %v152, 1.0
    %v154 = vmul.f32 %v153, %v148
    %v155 = vand.u32 2147483647, %v148
    %vm156 = vcmp.lt.f32.partialorder %v155, 0.0004427343
    %v157 = vsel %vm156, %v154, %v151
    %v158 = vsub.f32 %v144, %v157
    %s159 = scalar_lea.vmem [#allocation5], 256
    %v160 = vld [vmem:[%s159] sm:$0xff]
    %v161 = vld [vmem:[%s159 + $0x8] sm:$0xff]
    %v162 = vld [vmem:[%s159 + $0x10] sm:$0xff]
    %v163 = vld [vmem:[%s159 + $0x18] sm:$0xff]
    %v164 = vld [vmem:[%s159 + $0x20] sm:$0xff]
    %v165 = vld [vmem:[%s159 + $0x28] sm:$0xff]
    %v166 = vld [vmem:[%s159 + $0x30] sm:$0xff]
    %v167 = vld [vmem:[%s159 + $0x38] sm:$0xff]
    %v168 = vld [vmem:[%s159 + $0x40] sm:$0xff]
    %v169 = vld [vmem:[%s159 + $0x48] sm:$0xff]
    %v170 = vld [vmem:[%s159 + $0x50] sm:$0xff]
    %v171 = vld [vmem:[%s159 + $0x58] sm:$0xff]
    %v172 = vld [vmem:[%s159 + $0x60] sm:$0xff]
    %v173 = vld [vmem:[%s159 + $0x68] sm:$0xff]
    %v174 = vld [vmem:[%s159 + $0x70] sm:$0xff]
    %v175 = vld [vmem:[%s159 + $0x78] sm:$0xff]
    %s176 = scalar_lea.vmem [#allocation7], 2
    %v177 = vld [vmem:[%s176] sm:$0x1]
    %v179 = vperm.slane %v177, 0
    %181 = vmatpush.msra.mxu0 %v175
    %182 = vmatpush.msra.mxu0 %v174
    %183 = vmatpush.msra.mxu0 %v173
    %184 = vmatpush.msra.mxu0 %v172
    %185 = vmatpush.msra.mxu0 %v171
    %186 = vmatpush.msra.mxu0 %v170
    %187 = vmatpush.msra.mxu0 %v169
    %188 = vmatpush.msra.mxu0 %v168
    %189 = vmatpush.msra.mxu0 %v167
    %190 = vmatpush.msra.mxu0 %v166
    %191 = vmatpush.msra.mxu0 %v165
    %192 = vmatpush.msra.mxu0 %v164
    %193 = vmatpush.msra.mxu0 %v163
    %194 = vmatpush.msra.mxu0 %v162
    %195 = vmatpush.msra.mxu0 %v161
    %196 = vmatpush.msra.mxu0 %v160
    %197 = vmatmul.f32.gmra.mxu0 %v158
    %v198 = vpop.f32.mrf.mxu0
    %v199 = vadd.f32 %v179, %v198
    %200 = vdwg.mxu0
    %v201 = vmax.f32 %v199, 0.0
    %s202 = scalar_lea.vmem [#allocation5], 384
    %v203 = vld [vmem:[%s202] sm:$0xff]
    %v204 = vld [vmem:[%s202 + $0x8] sm:$0xff]
    %v205 = vld [vmem:[%s202 + $0x10] sm:$0xff]
    %v206 = vld [vmem:[%s202 + $0x18] sm:$0xff]
    %v207 = vld [vmem:[%s202 + $0x20] sm:$0xff]
    %v208 = vld [vmem:[%s202 + $0x28] sm:$0xff]
    %v209 = vld [vmem:[%s202 + $0x30] sm:$0xff]
    %v210 = vld [vmem:[%s202 + $0x38] sm:$0xff]
    %v211 = vld [vmem:[%s202 + $0x40] sm:$0xff]
    %v212 = vld [vmem:[%s202 + $0x48] sm:$0xff]
    %v213 = vld [vmem:[%s202 + $0x50] sm:$0xff]
    %v214 = vld [vmem:[%s202 + $0x58] sm:$0xff]
    %v215 = vld [vmem:[%s202 + $0x60] sm:$0xff]
    %v216 = vld [vmem:[%s202 + $0x68] sm:$0xff]
    %v217 = vld [vmem:[%s202 + $0x70] sm:$0xff]
    %v218 = vld [vmem:[%s202 + $0x78] sm:$0xff]
    %s219 = scalar_lea.vmem [#allocation7], 3
    %v220 = vld [vmem:[%s219] sm:$0x1]
    %v222 = vperm.slane %v220, 0
    %224 = vmatpush.msra.mxu0 %v218
    %225 = vmatpush.msra.mxu0 %v217
    %226 = vmatpush.msra.mxu0 %v216
    %227 = vmatpush.msra.mxu0 %v215
    %228 = vmatpush.msra.mxu0 %v214
    %229 = vmatpush.msra.mxu0 %v213
    %230 = vmatpush.msra.mxu0 %v212
    %231 = vmatpush.msra.mxu0 %v211
    %232 = vmatpush.msra.mxu0 %v210
    %233 = vmatpush.msra.mxu0 %v209
    %234 = vmatpush.msra.mxu0 %v208
    %235 = vmatpush.msra.mxu0 %v207
    %236 = vmatpush.msra.mxu0 %v206
    %237 = vmatpush.msra.mxu0 %v205
    %238 = vmatpush.msra.mxu0 %v204
    %239 = vmatpush.msra.mxu0 %v203
    %240 = vmatmul.f32.gmra.mxu0 %v201
    %v241 = vpop.f32.mrf.mxu0
    %v242 = vadd.f32 %v222, %v241
    %243 = vdwg.mxu0
    %v244 = vmax.f32 %v242, 0.0
    %s245 = scalar_lea.vmem [#allocation5], 512
    %v246 = vld [vmem:[%s245] sm:$0xff]
    %v247 = vld [vmem:[%s245 + $0x8] sm:$0xff]
    %v248 = vld [vmem:[%s245 + $0x10] sm:$0xff]
    %v249 = vld [vmem:[%s245 + $0x18] sm:$0xff]
    %v250 = vld [vmem:[%s245 + $0x20] sm:$0xff]
    %v251 = vld [vmem:[%s245 + $0x28] sm:$0xff]
    %v252 = vld [vmem:[%s245 + $0x30] sm:$0xff]
    %v253 = vld [vmem:[%s245 + $0x38] sm:$0xff]
    %v254 = vld [vmem:[%s245 + $0x40] sm:$0xff]
    %v255 = vld [vmem:[%s245 + $0x48] sm:$0xff]
    %v256 = vld [vmem:[%s245 + $0x50] sm:$0xff]
    %v257 = vld [vmem:[%s245 + $0x58] sm:$0xff]
    %v258 = vld [vmem:[%s245 + $0x60] sm:$0xff]
    %v259 = vld [vmem:[%s245 + $0x68] sm:$0xff]
    %v260 = vld [vmem:[%s245 + $0x70] sm:$0xff]
    %v261 = vld [vmem:[%s245 + $0x78] sm:$0xff]
    %s262 = scalar_lea.vmem [#allocation7], 4
    %v263 = vld [vmem:[%s262] sm:$0x1]
    %v265 = vperm.slane %v263, 0
    %267 = vmatpush.msra.mxu0 %v261
    %268 = vmatpush.msra.mxu0 %v260
    %269 = vmatpush.msra.mxu0 %v259
    %270 = vmatpush.msra.mxu0 %v258
    %271 = vmatpush.msra.mxu0 %v257
    %272 = vmatpush.msra.mxu0 %v256
    %273 = vmatpush.msra.mxu0 %v255
    %274 = vmatpush.msra.mxu0 %v254
    %275 = vmatpush.msra.mxu0 %v253
    %276 = vmatpush.msra.mxu0 %v252
    %277 = vmatpush.msra.mxu0 %v251
    %278 = vmatpush.msra.mxu0 %v250
    %279 = vmatpush.msra.mxu0 %v249
    %280 = vmatpush.msra.mxu0 %v248
    %281 = vmatpush.msra.mxu0 %v247
    %282 = vmatpush.msra.mxu0 %v246
    %283 = vmatmul.f32.gmra.mxu0 %v244
    %v284 = vpop.f32.mrf.mxu0
    %v285 = vadd.f32 %v265, %v284
    %286 = vdwg.mxu0
    %v287 = vtanh.pop %v285
    %s288 = scalar_lea.vmem [#allocation5], 640
    %v289 = vld [vmem:[%s288] sm:$0xff]
    %v290 = vld [vmem:[%s288 + $0x8] sm:$0xff]
    %v291 = vld [vmem:[%s288 + $0x10] sm:$0xff]
    %v292 = vld [vmem:[%s288 + $0x18] sm:$0xff]
    %v293 = vld [vmem:[%s288 + $0x20] sm:$0xff]
    %v294 = vld [vmem:[%s288 + $0x28] sm:$0xff]
    %v295 = vld [vmem:[%s288 + $0x30] sm:$0xff]
    %v296 = vld [vmem:[%s288 + $0x38] sm:$0xff]
    %v297 = vld [vmem:[%s288 + $0x40] sm:$0xff]
    %v298 = vld [vmem:[%s288 + $0x48] sm:$0xff]
    %v299 = vld [vmem:[%s288 + $0x50] sm:$0xff]
    %v300 = vld [vmem:[%s288 + $0x58] sm:$0xff]
    %v301 = vld [vmem:[%s288 + $0x60] sm:$0xff]
    %v302 = vld [vmem:[%s288 + $0x68] sm:$0xff]
    %v303 = vld [vmem:[%s288 + $0x70] sm:$0xff]
    %v304 = vld [vmem:[%s288 + $0x78] sm:$0xff]
    %s305 = scalar_lea.vmem [#allocation7], 5
    %v306 = vld [vmem:[%s305] sm:$0x1]
    %v308 = vperm.slane %v306, 0
    %310 = vmatpush.msra.mxu0 %v304
    %311 = vmatpush.msra.mxu0 %v303
    %312 = vmatpush.msra.mxu0 %v302
    %313 = vmatpush.msra.mxu0 %v301
    %314 = vmatpush.msra.mxu0 %v300
    %315 = vmatpush.msra.mxu0 %v299
    %316 = vmatpush.msra.mxu0 %v298
    %317 = vmatpush.msra.mxu0 %v297
    %318 = vmatpush.msra.mxu0 %v296
    %319 = vmatpush.msra.mxu0 %v295
    %320 = vmatpush.msra.mxu0 %v294
    %321 = vmatpush.msra.mxu0 %v293
    %322 = vmatpush.msra.mxu0 %v292
    %323 = vmatpush.msra.mxu0 %v291
    %324 = vmatpush.msra.mxu0 %v290
    %325 = vmatpush.msra.mxu0 %v289
    %326 = vmatmul.f32.gmra.mxu0 %v287
    %v327 = vpop.f32.mrf.mxu0
    %v328 = vadd.f32 %v308, %v327
    %329 = vdwg.mxu0
    %v330 = vmin.f32 %v328, 0.0
    %v331 = vand.u32 2147483647, %v328
    %v332 = vsub.f32 0.0, %v331
    %v333 = vmul.f32 %v332, 1.442695
    %v334 = vpow.pop %v333
    %v335 = vadd.f32 %v334, 1.0
    %v336 = vlog2.pop %v335
    %v337 = vmul.f32 %v336, 0.6931472
    %v338 = vmul.f32 -0.5, %v334
    %v339 = vadd.f32 %v338, 1.0
    %v340 = vmul.f32 %v339, %v334
    %v341 = vand.u32 2147483647, %v334
    %vm342 = vcmp.lt.f32.partialorder %v341, 0.0004427343
    %v343 = vsel %vm342, %v340, %v337
    %v344 = vsub.f32 %v330, %v343
    %s345 = scalar_lea.vmem [#allocation5], 768
    %v346 = vld [vmem:[%s345] sm:$0xff]
    %v347 = vld [vmem:[%s345 + $0x8] sm:$0xff]
    %v348 = vld [vmem:[%s345 + $0x10] sm:$0xff]
    %v349 = vld [vmem:[%s345 + $0x18] sm:$0xff]
    %v350 = vld [vmem:[%s345 + $0x20] sm:$0xff]
    %v351 = vld [vmem:[%s345 + $0x28] sm:$0xff]
    %v352 = vld [vmem:[%s345 + $0x30] sm:$0xff]
    %v353 = vld [vmem:[%s345 + $0x38] sm:$0xff]
    %v354 = vld [vmem:[%s345 + $0x40] sm:$0xff]
    %v355 = vld [vmem:[%s345 + $0x48] sm:$0xff]
    %v356 = vld [vmem:[%s345 + $0x50] sm:$0xff]
    %v357 = vld [vmem:[%s345 + $0x58] sm:$0xff]
    %v358 = vld [vmem:[%s345 + $0x60] sm:$0xff]
    %v359 = vld [vmem:[%s345 + $0x68] sm:$0xff]
    %v360 = vld [vmem:[%s345 + $0x70] sm:$0xff]
    %v361 = vld [vmem:[%s345 + $0x78] sm:$0xff]
    %s362 = scalar_lea.vmem [#allocation7], 6
    %v363 = vld [vmem:[%s362] sm:$0x1]
    %v365 = vperm.slane %v363, 0
    %367 = vmatpush.msra.mxu0 %v361
    %368 = vmatpush.msra.mxu0 %v360
    %369 = vmatpush.msra.mxu0 %v359
    %370 = vmatpush.msra.mxu0 %v358
    %371 = vmatpush.msra.mxu0 %v357
    %372 = vmatpush.msra.mxu0 %v356
    %373 = vmatpush.msra.mxu0 %v355
    %374 = vmatpush.msra.mxu0 %v354
    %375 = vmatpush.msra.mxu0 %v353
    %376 = vmatpush.msra.mxu0 %v352
    %377 = vmatpush.msra.mxu0 %v351
    %378 = vmatpush.msra.mxu0 %v350
    %379 = vmatpush.msra.mxu0 %v349
    %380 = vmatpush.msra.mxu0 %v348
    %381 = vmatpush.msra.mxu0 %v347
    %382 = vmatpush.msra.mxu0 %v346
    %383 = vmatmul.f32.gmra.mxu0 %v344
    %v384 = vpop.f32.mrf.mxu0
    %v385 = vadd.f32 %v365, %v384
    %386 = vdwg.mxu0
    %387 = vst [vmem:[#allocation8] sm:$0xff] %v385
    // Predicated region
    $region26: #{tpu_custom_call.1} parent=1 // pred_check
      _
    $region27: #{tpu_custom_call.1} parent=1 // pred_check_branch
      %389 = sbr.rel (0) target = $region29
    $region28: #{tpu_custom_call.1} parent=1 // pred_region
      %391 = vsyncadd [#allocation4], 0
      %s393 = sshll.u32 [#allocation8], 4
      %s394 = int_to_ptr.vmem [resolvable:$true] %s393
      %s395 = sshll.u32 %s3, 4
      %s396 = int_to_ptr.hbm [resolvable:$true] %s395
      %398 = dma.vmem_to_hbm [thread:$0]  %s394, 128, %s396, [#allocation4]
    $region29: #{tpu_custom_call.1} parent=1 // pred_fallthru
      _
    // Predicated region
    $region30: #{tpu_custom_call.1} parent=1 // pred_check
      _
    $region31: #{tpu_custom_call.1} parent=1 // pred_check_branch
      %400 = sbr.rel (0) target = $region33
    $region32: #{tpu_custom_call.1} parent=1 // pred_region
      %402 = dma.done [#allocation4], 128
    $region33: #{tpu_custom_call.1} parent=1 // pred_fallthru
      _
    %403 = vsyncpa [#allocation3], 1
    %404 = vsyncpa [#allocation6], 1
    %405 = vsyncpa [#allocation4], 1

</llo_original>
